<compile_context>
chip_gen: v7x
topology: tpu7x:2x2x1
jax: 0.10.0
libtpu: 0.0.40
codegen_flags: <defaults>
</compile_context>

<pallas_src>
import jax
import jax.numpy as jnp
import numpy as np
from jax.experimental import pallas as pl
from jax.experimental.pallas import tpu as pltpu

IGNORE = 9999
GAMMA = 2.0          # gamma == 2.0 specialization: pow(x, 2.0) computed as x*x
EPS = 1e-8           # focal_loss eps
ONE_HOT_EPS = 1e-6   # eps added by one_hot()
W_MIX = 0.5


def _round_up(x, m):
    return ((x + m - 1) // m) * m


# ---------------------------------------------------------------------------
# Kernel 1: per-pixel focal loss reduced to per-batch (sum, valid count),
# per-batch per-class foreground totals (gts), and a packed key slab
# (key = -err with fg packed into the mantissa LSB) for Lovasz.
# Grid = (B, n_tiles); batch axis is "parallel" (megacore-friendly), the tile
# axis is the reduction axis with per-batch resident accumulators.
# ---------------------------------------------------------------------------
def _focal_prep_kernel(logits_ref, labels_ref, alpha_ref,
                       fsum_ref, cnt_ref, gts_ref, key_ref):
    @pl.when(pl.program_id(1) == 0)
    def _():
        fsum_ref[...] = jnp.zeros_like(fsum_ref)
        cnt_ref[...] = jnp.zeros_like(cnt_ref)
        gts_ref[...] = jnp.zeros_like(gts_ref)

    logits = logits_ref[...]            # (C, TN) f32   (log-space input)
    labels = labels_ref[...]            # (1, TN) i32
    alpha = alpha_ref[...]              # (C, 1) f32
    C, TN = logits.shape

    valid = labels != IGNORE            # (1, TN) bool
    validf = valid.astype(jnp.float32)

    # numerically stable softmax; divide hoisted to one (1,TN) reciprocal
    m = jnp.max(logits, axis=0, keepdims=True)        # (1, TN)
    shifted = logits - m                               # (C, TN)
    e = jnp.exp(shifted)                               # (C, TN)  -- only big exp
    sum_e = jnp.sum(e, axis=0, keepdims=True)          # (1, TN)
    inv_sum = pl.reciprocal(sum_e)                     # (1, TN)
    p = e * inv_sum + EPS                              # softmax + eps (focal weight)
    # log(p) as log-softmax: one (1,TN) log instead of a (C,TN) log.
    logp = shifted - jnp.log(sum_e)                    # (C, TN)

    cls = jax.lax.broadcasted_iota(jnp.int32, (C, TN), 0)
    tgt = jnp.where(valid, labels, 0)                  # ignored -> class 0 (torch target_copy)
    onehot = jnp.where(cls == tgt, 1.0, 0.0) + ONE_HOT_EPS

    omp = 1.0 - p
    focal = -(omp * omp) * logp                        # (1 - p)**gamma, gamma=2.0
    loss_tmp = jnp.sum(onehot * focal, axis=0, keepdims=True)       # (1, TN)

    # per-pixel alpha: alpha[c] where label == c, 0 at ignored/padded pixels
    alpha_px = jnp.sum(jnp.where(cls == labels, alpha, 0.0),
                       axis=0, keepdims=True)                       # (1, TN)

    fsum_ref[...] += jnp.sum(loss_tmp * validf * alpha_px, keepdims=True)
    cnt_ref[...] += jnp.sum(validf, keepdims=True)

    # Lovasz preparation: class probabilities are exp(input) (LovaszSoftmax3d).
    # Reuse the softmax numerator: exp(logits) = e * exp(m) -> one (1,TN) exp.
    probs = e * jnp.exp(m)
    is_fg = cls == labels                               # False at ignored/padded
    fg = jnp.where(is_fg, 1.0, 0.0)                     # (C, TN)
    gts_ref[...] += jnp.sum(fg, axis=1, keepdims=True)  # (C, 1)

    # Pack fg into the mantissa LSB of (-err): one f32 slab carries both
    # streams and the inter-kernel sort becomes key-only.
    # Invariant: ignored/padded pixels get key = 0.0 (err = 0, fg bit = 0) and
    # sort to the tail where err = 0 zeroes their contribution.
    neg_err = jnp.where(valid, -jnp.abs(fg - probs), 0.0)
    bits = pltpu.bitcast(neg_err, jnp.int32)
    fg_bit = jnp.where(is_fg, jnp.int32(1), jnp.int32(0))
    packed = (bits & jnp.int32(-2)) | fg_bit            # clear LSB, set fg bit
    key_ref[...] = pltpu.bitcast(packed, jnp.float32)


# ---------------------------------------------------------------------------
# Kernel 2: Lovasz-Softmax on the (already ascending-sorted packed -err) keys.
# Chunked over the pixel axis; within-chunk inclusive cumsum of fg is a
# Hillis-Steele scan (pltpu.roll + masked add, log2(CHUNK) steps); the running
# cumsum / previous-jaccard / per-class loss are carried in VMEM scratch.
# cum_bg uses the identity: cum_bg = global_position - cum_fg.
# ---------------------------------------------------------------------------
def _lovasz_kernel(gts_ref, key_ref, out_ref,
                   carry_ref, jacp_ref, lacc_ref):
    i = pl.program_id(0)
    nsteps = pl.num_programs(0)

    @pl.when(i == 0)
    def _():
        carry_ref[...] = jnp.zeros_like(carry_ref)
        jacp_ref[...] = jnp.zeros_like(jacp_ref)
        lacc_ref[...] = jnp.zeros_like(lacc_ref)
        out_ref[...] = jnp.zeros_like(out_ref)

    key = key_ref[...]          # (C, CHUNK) packed -err keys, globally sorted asc.
    gts = gts_ref[...]          # (C, 1) per-class total foreground count
    C, CH = key.shape

    bits = pltpu.bitcast(key, jnp.int32)
    fg = jnp.where((bits & 1) != 0, 1.0, 0.0)           # fg indicator from LSB

    lane = jax.lax.broadcasted_iota(jnp.int32, (C, CH), 1)

    # Hillis-Steele inclusive scan of fg along the lane axis (XLU roll + VPU add).
    x = fg
    off = 1
    while off < CH:                         # static Python loop: ~log2(CHUNK) steps
        sh = pltpu.roll(x, shift=off, axis=1)
        x = x + jnp.where(lane >= off, sh, 0.0)
        off *= 2

    cum_fg = carry_ref[...] + x                                 # global inclusive cumsum
    pos1 = (i * CH + lane + 1).astype(jnp.float32)              # 1-based global position
    cum_bg = pos1 - cum_fg                                      # cumsum(1 - fg), fg in {0,1}

    intersection = gts - cum_fg
    union = gts + cum_bg                                        # >= 1, never zero
    jaccard = 1.0 - intersection / union

    # lovasz_grad: first difference of jaccard, carried across chunk boundaries.
    prev = pltpu.roll(jaccard, shift=1, axis=1)
    prev = jnp.where(lane == 0, jacp_ref[...], prev)
    grad = jaccard - prev

    # key ~= -err (LSB packing perturbs err by <= 1 ulp): accumulate -(key*grad).
    lacc_ref[...] -= jnp.sum(key * grad, axis=1, keepdims=True)     # (C, 1)
    carry_ref[...] = cum_fg[:, CH - 1:CH]
    jacp_ref[...] = jaccard[:, CH - 1:CH]

    @pl.when(i == nsteps - 1)
    def _():
        present = (gts > 0.0).astype(jnp.float32)                   # classes='present'
        out_ref[...] = (jnp.sum(lacc_ref[...] * present, keepdims=True)
                        / jnp.sum(present, keepdims=True))


# ---------------------------------------------------------------------------
# Wrapper: layout folding (no transpose), key-only descending-error sort
# between the two kernels, mixing.
# ---------------------------------------------------------------------------
def sum_focal_lovasz(logits, labels, alpha, w=W_MIX):
    B, C, D, H, Wd = logits.shape
    nper = D * H * Wd                     # pixels per batch image

    # Fixed large pixel tile (no divisor search).  Pad the per-image pixel
    # count up to a multiple of TN; padded labels are IGNORE so tail lanes are
    # inert.  Halve TN (floor 512) only if padding would exceed ~12.5% of the
    # real pixels, so awkward volume sizes never degrade to 128-wide tiles.
    # VMEM is nowhere near binding for this kernel on any TPU generation.
    npad128 = _round_up(nper, 128)
    if npad128 <= 4096:
        TN = npad128
    else:
        TN = 4096
        while TN > 512 and (_round_up(nper, TN) - nper) * 8 > nper:
            TN //= 2
    npad = _round_up(nper, TN)
    n_tiles = npad // TN
    Ntot = B * npad

    # Free reshapes (contiguous trailing dims); NO transpose — the class-major
    # (C, TN) slab layout is produced by the BlockSpec index_maps.
    lg = logits.reshape(B, C, nper).astype(jnp.float32)
    lb = labels.reshape(B, 1, nper).astype(jnp.int32)
    if npad != nper:
        lg = jnp.pad(lg, ((0, 0), (0, 0), (0, npad - nper)))
        lb = jnp.pad(lb, ((0, 0), (0, 0), (0, npad - nper)), constant_values=IGNORE)
    al = jnp.asarray(alpha, jnp.float32).reshape(C, 1)

    ce1 = pl.CostEstimate(
        flops=int(30 * C * Ntot),
        transcendentals=int((C + 3) * Ntot),                 # exp(C,TN)+exp/log/rcp(1,TN)
        bytes_accessed=int(4 * ((C + 1) * Ntot + max(C, 8) * Ntot)),
    )

    fsum, cnt, gts, keys = pl.pallas_call(
        _focal_prep_kernel,
        grid=(B, n_tiles),
        in_specs=[
            pl.BlockSpec((None, C, TN), lambda b, t: (b, 0, t)),
            pl.BlockSpec((None, 1, TN), lambda b, t: (b, 0, t)),
            pl.BlockSpec((C, 1), lambda b, t: (0, 0)),
        ],
        out_specs=(
            # per-batch partial accumulators -> batch axis can run in parallel
            pl.BlockSpec((None, 1, 1), lambda b, t: (b, 0, 0)),
            pl.BlockSpec((None, 1, 1), lambda b, t: (b, 0, 0)),
            pl.BlockSpec((None, C, 1), lambda b, t: (b, 0, 0)),
            # packed keys written straight into a class-major (C, B*npad) slab:
            pl.BlockSpec((C, TN), lambda b, t, T=n_tiles: (0, b * T + t)),
        ),
        out_shape=(
            jax.ShapeDtypeStruct((B, 1, 1), jnp.float32),
            jax.ShapeDtypeStruct((B, 1, 1), jnp.float32),
            jax.ShapeDtypeStruct((B, C, 1), jnp.float32),
            jax.ShapeDtypeStruct((C, Ntot), jnp.float32),
        ),
        compiler_params=pltpu.CompilerParams(
            dimension_semantics=("parallel", "arbitrary"),
            vmem_limit_bytes=32 * 1024 * 1024),
        cost_estimate=ce1,
    )(lg, lb, al)

    # reduction='mean' over valid pixels; tiny B-way reduction done in JAX.
    focal_mean = jnp.sum(fsum) / jnp.sum(cnt)
    gts_total = jnp.sum(gts, axis=0)                      # (C, 1)

    # TODO(synk): torch.sort (descending, per class) has no Mosaic lowering; a
    # single key-only unstable ascending sort of the packed (-err) keys is done
    # in plain JAX between the two kernels (ascending -err == descending err).
    keys_sorted = jax.lax.sort(keys, dimension=1, is_stable=False)

    # Lovasz chunk: as large as possible (fewer serialized sequential grid
    # steps); each doubling costs only one extra roll+masked-add scan step.
    CHUNK = TN
    while CHUNK * 2 <= 8192 and Ntot % (CHUNK * 2) == 0:
        CHUNK *= 2
    n_chunks = Ntot // CHUNK

    log2c = max(CHUNK.bit_length() - 1, 1)
    ce2 = pl.CostEstimate(
        flops=int((4 * log2c + 14) * C * Ntot),
        transcendentals=0,                                  # kernel 2 has no exp/log
        bytes_accessed=int(4 * (max(C, 8) * Ntot + C + 1)),
    )

    lov = pl.pallas_call(
        _lovasz_kernel,
        grid=(n_chunks,),
        in_specs=[
            pl.BlockSpec((C, 1), lambda i: (0, 0)),
            pl.BlockSpec((C, CHUNK), lambda i: (0, i)),
        ],
        out_specs=pl.BlockSpec((1, 1), lambda i: (0, 0)),
        out_shape=jax.ShapeDtypeStruct((1, 1), jnp.float32),
        scratch_shapes=[pltpu.VMEM((C, 1), jnp.float32),   # running cum_fg carry
                        pltpu.VMEM((C, 1), jnp.float32),   # previous-chunk jaccard
                        pltpu.VMEM((C, 1), jnp.float32)],  # per-class loss accumulator
        compiler_params=pltpu.CompilerParams(
            dimension_semantics=("arbitrary",),
            vmem_limit_bytes=32 * 1024 * 1024),
        cost_estimate=ce2,
    )(gts_total, keys_sorted)[0, 0]

    return w * focal_mean + (1.0 - w) * lov


# ---------------------------------------------------------------------------
# Pure-numpy reference mirroring the PyTorch module semantics.
# ---------------------------------------------------------------------------
def _numpy_reference(logits, labels, alpha, ignore=IGNORE, eps=EPS, w=W_MIX):
    logits = logits.astype(np.float64)
    B, C = logits.shape[:2]
    valid = labels != ignore
    tgt = np.where(valid, labels, 0)

    m = logits.max(axis=1, keepdims=True)
    e = np.exp(logits - m)
    p = e / e.sum(axis=1, keepdims=True) + eps
    cls_axis = np.arange(C).reshape(1, C, 1, 1, 1)
    onehot = (cls_axis == tgt[:, None]).astype(np.float64) + ONE_HOT_EPS
    omp = 1.0 - p
    focal = -(omp * omp) * np.log(p)
    loss_tmp = (onehot * focal).sum(axis=1)
    alpha_mask = np.zeros(labels.shape, np.float64)
    for idx, a in enumerate(alpha):
        alpha_mask[labels == idx] = a
    loss_tmp = loss_tmp * valid.astype(np.float64) * alpha_mask
    focal_mean = loss_tmp.sum() / valid.sum()

    probs = np.exp(logits)
    probs_flat = probs.transpose(0, 2, 3, 4, 1).reshape(-1, C)
    labels_flat = labels.reshape(-1)
    vm = labels_flat != ignore
    vp, vl = probs_flat[vm], labels_flat[vm]
    losses = []
    for c in range(C):
        fgc = (vl == c).astype(np.float64)
        if fgc.sum() == 0:
            continue
        errors = np.abs(fgc - vp[:, c])
        order = np.argsort(-errors, kind="stable")
        es, fs = errors[order], fgc[order]
        gts = fs.sum()
        inter = gts - np.cumsum(fs)
        union = gts + np.cumsum(1.0 - fs)
        jac = 1.0 - inter / union
        grad = jac.copy()
        grad[1:] = jac[1:] - jac[:-1]
        losses.append(float(np.dot(es, grad)))
    lov = float(np.mean(losses))
    return w * focal_mean + (1.0 - w) * lov


if __name__ == "__main__":
    key = jax.random.PRNGKey(0)
    k1, k2, k3 = jax.random.split(key, 3)
    B, C, D, H, Wd = 2, 4, 4, 8, 8

    logits = jax.random.normal(k1, (B, C, D, H, Wd), jnp.float32)   # log-space "probas"
    labels = jax.random.randint(k2, (B, D, H, Wd), 0, C)
    ign = jax.random.uniform(k3, (B, D, H, Wd)) < 0.1               # some ignored pixels
    labels = jnp.where(ign, IGNORE, labels).astype(jnp.int32)

    alpha = [0.25, 0.5, 0.75, 1.0]   # deterministic per-class focal weights

    out = sum_focal_lovasz(logits, labels, alpha, w=W_MIX)
    out = jax.block_until_ready(out)

    ref = _numpy_reference(np.asarray(logits), np.asarray(labels), alpha)
    np.testing.assert_allclose(float(out), ref, rtol=2e-3, atol=2e-3)
    print("KERNEL_OK")
</pallas_src>

<mosaic_0001>
module attributes {stable_mosaic.version = 11 : i64} {
  func.func @_focal_prep_kernel(%arg0: i32, %arg1: i32, %arg2: memref<1x4x256xf32, #tpu.memory_space<vmem>>, %arg3: memref<1x1x256xi32, #tpu.memory_space<vmem>>, %arg4: memref<4x1xf32, #tpu.memory_space<vmem>>, %arg5: memref<1x1x1xf32, #tpu.memory_space<vmem>>, %arg6: memref<1x1x1xf32, #tpu.memory_space<vmem>>, %arg7: memref<1x4x1xf32, #tpu.memory_space<vmem>>, %arg8: memref<4x256xf32, #tpu.memory_space<vmem>>) attributes {dimension_semantics = [#tpu.dimension_semantics<parallel>, #tpu.dimension_semantics<arbitrary>], iteration_bounds = array<i64: 2, 1>, scalar_prefetch = 0 : i64, scratch_operands = 0 : i64, tpu.core_type = #tpu.core_type<tc>, window_params = [{transform_indices = @transform_0, window_bounds = array<i64: 1, 4, 256>}, {transform_indices = @transform_1, window_bounds = array<i64: 1, 1, 256>}, {pipeline_mode = #tpu.pipeline_mode<synchronous>, transform_indices = @transform_2, window_bounds = array<i64: 4, 1>}, {transform_indices = @transform_3, window_bounds = array<i64: 1, 1, 1>}, {transform_indices = @transform_4, window_bounds = array<i64: 1, 1, 1>}, {transform_indices = @transform_5, window_bounds = array<i64: 1, 4, 1>}, {transform_indices = @transform_6, window_bounds = array<i64: 4, 256>}]} {
    %c0_i32 = arith.constant 0 : i32
    %0 = arith.cmpi eq, %arg1, %c0_i32 : i32
    %1 = arith.extui %0 : i1 to i32
    %c0_i32_0 = arith.constant 0 : i32
    %2 = arith.cmpi ne, %1, %c0_i32_0 : i32
    scf.if %2 {
      %cst_47 = arith.constant 0.000000e+00 : f32
      %111 = vector.broadcast %cst_47 : f32 to vector<1x1xf32>
      %c0_48 = arith.constant 0 : index
      %c0_49 = arith.constant 0 : index
      %c0_50 = arith.constant 0 : index
      %112 = vector.load %arg5[%c0_48, %c0_49, %c0_50] : memref<1x1x1xf32, #tpu.memory_space<vmem>>, vector<1x1x1xf32>
      %113 = vector.shape_cast %112 : vector<1x1x1xf32> to vector<1x1xf32>
      %114 = vector.shape_cast %111 : vector<1x1xf32> to vector<1x1x1xf32>
      tpu.vector_store %arg5[%c0_48, %c0_49, %c0_50], %114 {strides = array<i32>} : memref<1x1x1xf32, #tpu.memory_space<vmem>>, vector<1x1x1xf32>,
      %cst_51 = arith.constant 0.000000e+00 : f32
      %115 = vector.broadcast %cst_51 : f32 to vector<1x1xf32>
      %c0_52 = arith.constant 0 : index
      %c0_53 = arith.constant 0 : index
      %c0_54 = arith.constant 0 : index
      %116 = vector.load %arg6[%c0_52, %c0_53, %c0_54] : memref<1x1x1xf32, #tpu.memory_space<vmem>>, vector<1x1x1xf32>
      %117 = vector.shape_cast %116 : vector<1x1x1xf32> to vector<1x1xf32>
      %118 = vector.shape_cast %115 : vector<1x1xf32> to vector<1x1x1xf32>
      tpu.vector_store %arg6[%c0_52, %c0_53, %c0_54], %118 {strides = array<i32>} : memref<1x1x1xf32, #tpu.memory_space<vmem>>, vector<1x1x1xf32>,
      %cst_55 = arith.constant 0.000000e+00 : f32
      %119 = vector.broadcast %cst_55 : f32 to vector<4x1xf32>
      %c0_56 = arith.constant 0 : index
      %c0_57 = arith.constant 0 : index
      %c0_58 = arith.constant 0 : index
      %120 = vector.load %arg7[%c0_56, %c0_57, %c0_58] : memref<1x4x1xf32, #tpu.memory_space<vmem>>, vector<1x4x1xf32>
      %121 = vector.shape_cast %120 : vector<1x4x1xf32> to vector<4x1xf32>
      %122 = vector.shape_cast %119 : vector<4x1xf32> to vector<1x4x1xf32>
      tpu.vector_store %arg7[%c0_56, %c0_57, %c0_58], %122 {strides = array<i32>} : memref<1x4x1xf32, #tpu.memory_space<vmem>>, vector<1x4x1xf32>,
    } else {
    }
    %c0 = arith.constant 0 : index
    %c0_1 = arith.constant 0 : index
    %c0_2 = arith.constant 0 : index
    %3 = vector.load %arg2[%c0, %c0_1, %c0_2] : memref<1x4x256xf32, #tpu.memory_space<vmem>>, vector<1x4x256xf32>
    %4 = vector.shape_cast %3 : vector<1x4x256xf32> to vector<4x256xf32>
    %c0_3 = arith.constant 0 : index
    %c0_4 = arith.constant 0 : index
    %c0_5 = arith.constant 0 : index
    %5 = vector.load %arg3[%c0_3, %c0_4, %c0_5] : memref<1x1x256xi32, #tpu.memory_space<vmem>>, vector<1x1x256xi32>
    %6 = vector.shape_cast %5 : vector<1x1x256xi32> to vector<1x256xi32>
    %c0_6 = arith.constant 0 : index
    %c0_7 = arith.constant 0 : index
    %7 = vector.load %arg4[%c0_6, %c0_7] : memref<4x1xf32, #tpu.memory_space<vmem>>, vector<4x1xf32>
    %c9999_i32 = arith.constant 9999 : i32
    %8 = vector.broadcast %c9999_i32 : i32 to vector<1x256xi32>
    %9 = arith.cmpi ne, %6, %8 : vector<1x256xi32>
    %10 = arith.extui %9 : vector<1x256xi1> to vector<1x256xi32>
    %11 = arith.sitofp %10 : vector<1x256xi32> to vector<1x256xf32>
    %cst = arith.constant dense<0xFF800000> : vector<256xf32>
    %12 = vector.multi_reduction <maximumf>, %4, %cst [0] : vector<4x256xf32> to vector<256xf32>
    %13 = vector.shape_cast %12 : vector<256xf32> to vector<1x256xf32>
    %14 = vector.broadcast %13 : vector<1x256xf32> to vector<4x256xf32>
    %15 = arith.subf %4, %14 : vector<4x256xf32>
    %16 = math.exp %15 : vector<4x256xf32>
    %cst_8 = arith.constant dense<0.000000e+00> : vector<256xf32>
    %17 = vector.multi_reduction <add>, %16, %cst_8 [0] : vector<4x256xf32> to vector<256xf32>
    %18 = vector.shape_cast %17 : vector<256xf32> to vector<1x256xf32>
    %19 = tpu.reciprocal %18 : vector<1x256xf32> -> vector<1x256xf32>
    %20 = vector.broadcast %19 : vector<1x256xf32> to vector<4x256xf32>
    %21 = arith.mulf %16, %20 : vector<4x256xf32>
    %cst_9 = arith.constant 9.99999993E-9 : f32
    %22 = vector.broadcast %cst_9 : f32 to vector<4x256xf32>
    %23 = arith.addf %21, %22 : vector<4x256xf32>
    %24 = math.log %18 : vector<1x256xf32>
    %25 = vector.broadcast %24 : vector<1x256xf32> to vector<4x256xf32>
    %26 = arith.subf %15, %25 : vector<4x256xf32>
    %27 = tpu.iota {dimensions = array<i32: 0>} : vector<4x256xi32>
    %c0_i32_10 = arith.constant 0 : i32
    %28 = vector.broadcast %c0_i32_10 : i32 to vector<1x256xi32>
    %29 = arith.select %9, %6, %28 : vector<1x256xi1>, vector<1x256xi32>
    %30 = vector.broadcast %29 : vector<1x256xi32> to vector<4x256xi32>
    %31 = arith.cmpi eq, %27, %30 : vector<4x256xi32>
    %cst_11 = arith.constant 1.000000e+00 : f32
    %cst_12 = arith.constant 0.000000e+00 : f32
    %32 = vector.broadcast %cst_11 : f32 to vector<4x256xf32>
    %33 = vector.broadcast %cst_12 : f32 to vector<4x256xf32>
    %34 = arith.select %31, %32, %33 : vector<4x256xi1>, vector<4x256xf32>
    %cst_13 = arith.constant 9.99999997E-7 : f32
    %35 = vector.broadcast %cst_13 : f32 to vector<4x256xf32>
    %36 = arith.addf %34, %35 : vector<4x256xf32>
    %cst_14 = arith.constant 1.000000e+00 : f32
    %37 = vector.broadcast %cst_14 : f32 to vector<4x256xf32>
    %38 = arith.subf %37, %23 : vector<4x256xf32>
    %39 = arith.mulf %38, %38 : vector<4x256xf32>
    %cst_15 = arith.constant 0.000000e+00 : f32
    %40 = vector.broadcast %cst_15 : f32 to vector<4x256xf32>
    %41 = arith.subf %40, %39 : vector<4x256xf32>
    %42 = arith.mulf %41, %26 : vector<4x256xf32>
    %43 = arith.mulf %36, %42 : vector<4x256xf32>
    %cst_16 = arith.constant dense<0.000000e+00> : vector<256xf32>
    %44 = vector.multi_reduction <add>, %43, %cst_16 [0] : vector<4x256xf32> to vector<256xf32>
    %45 = vector.shape_cast %44 : vector<256xf32> to vector<1x256xf32>
    %46 = vector.broadcast %6 : vector<1x256xi32> to vector<4x256xi32>
    %47 = arith.cmpi eq, %27, %46 : vector<4x256xi32>
    %cst_17 = arith.constant 0.000000e+00 : f32
    %48 = vector.shape_cast %7 : vector<4x1xf32> to vector<4x1xf32>
    %49 = vector.broadcast %48 : vector<4x1xf32> to vector<4x256xf32>
    %50 = vector.broadcast %cst_17 : f32 to vector<4x256xf32>
    %51 = arith.select %47, %49, %50 : vector<4x256xi1>, vector<4x256xf32>
    %cst_18 = arith.constant dense<0.000000e+00> : vector<256xf32>
    %52 = vector.multi_reduction <add>, %51, %cst_18 [0] : vector<4x256xf32> to vector<256xf32>
    %53 = vector.shape_cast %52 : vector<256xf32> to vector<1x256xf32>
    %c0_19 = arith.constant 0 : index
    %c0_20 = arith.constant 0 : index
    %c0_21 = arith.constant 0 : index
    %54 = vector.load %arg5[%c0_19, %c0_20, %c0_21] : memref<1x1x1xf32, #tpu.memory_space<vmem>>, vector<1x1x1xf32>
    %55 = vector.shape_cast %54 : vector<1x1x1xf32> to vector<1x1xf32>
    %56 = arith.mulf %45, %11 : vector<1x256xf32>
    %57 = arith.mulf %56, %53 : vector<1x256xf32>
    %58 = vector.shape_cast %57 : vector<1x256xf32> to vector<1x1x256xf32>
    %cst_22 = arith.constant dense<0.000000e+00> : vector<1xf32>
    %59 = vector.multi_reduction <add>, %58, %cst_22 [1, 2] : vector<1x1x256xf32> to vector<1xf32>
    %60 = vector.shape_cast %59 : vector<1xf32> to vector<1x1x1xf32>
    %61 = vector.extract %60[0, 0, 0] : f32 from vector<1x1x1xf32>
    %62 = vector.broadcast %61 : f32 to vector<1x1xf32>
    %63 = arith.addf %55, %62 : vector<1x1xf32>
    %c0_23 = arith.constant 0 : index
    %c0_24 = arith.constant 0 : index
    %c0_25 = arith.constant 0 : index
    %64 = vector.load %arg5[%c0_23, %c0_24, %c0_25] : memref<1x1x1xf32, #tpu.memory_space<vmem>>, vector<1x1x1xf32>
    %65 = vector.shape_cast %64 : vector<1x1x1xf32> to vector<1x1xf32>
    %66 = vector.shape_cast %63 : vector<1x1xf32> to vector<1x1x1xf32>
    tpu.vector_store %arg5[%c0_23, %c0_24, %c0_25], %66 {strides = array<i32>} : memref<1x1x1xf32, #tpu.memory_space<vmem>>, vector<1x1x1xf32>,
    %c0_26 = arith.constant 0 : index
    %c0_27 = arith.constant 0 : index
    %c0_28 = arith.constant 0 : index
    %67 = vector.load %arg6[%c0_26, %c0_27, %c0_28] : memref<1x1x1xf32, #tpu.memory_space<vmem>>, vector<1x1x1xf32>
    %68 = vector.shape_cast %67 : vector<1x1x1xf32> to vector<1x1xf32>
    %69 = vector.shape_cast %11 : vector<1x256xf32> to vector<1x1x256xf32>
    %cst_29 = arith.constant dense<0.000000e+00> : vector<1xf32>
    %70 = vector.multi_reduction <add>, %69, %cst_29 [1, 2] : vector<1x1x256xf32> to vector<1xf32>
    %71 = vector.shape_cast %70 : vector<1xf32> to vector<1x1x1xf32>
    %72 = vector.extract %71[0, 0, 0] : f32 from vector<1x1x1xf32>
    %73 = vector.broadcast %72 : f32 to vector<1x1xf32>
    %74 = arith.addf %68, %73 : vector<1x1xf32>
    %c0_30 = arith.constant 0 : index
    %c0_31 = arith.constant 0 : index
    %c0_32 = arith.constant 0 : index
    %75 = vector.load %arg6[%c0_30, %c0_31, %c0_32] : memref<1x1x1xf32, #tpu.memory_space<vmem>>, vector<1x1x1xf32>
    %76 = vector.shape_cast %75 : vector<1x1x1xf32> to vector<1x1xf32>
    %77 = vector.shape_cast %74 : vector<1x1xf32> to vector<1x1x1xf32>
    tpu.vector_store %arg6[%c0_30, %c0_31, %c0_32], %77 {strides = array<i32>} : memref<1x1x1xf32, #tpu.memory_space<vmem>>, vector<1x1x1xf32>,
    %78 = math.exp %13 : vector<1x256xf32>
    %79 = vector.broadcast %78 : vector<1x256xf32> to vector<4x256xf32>
    %80 = arith.mulf %16, %79 : vector<4x256xf32>
    %81 = vector.broadcast %6 : vector<1x256xi32> to vector<4x256xi32>
    %82 = arith.cmpi eq, %27, %81 : vector<4x256xi32>
    %cst_33 = arith.constant 1.000000e+00 : f32
    %cst_34 = arith.constant 0.000000e+00 : f32
    %83 = vector.broadcast %cst_33 : f32 to vector<4x256xf32>
    %84 = vector.broadcast %cst_34 : f32 to vector<4x256xf32>
    %85 = arith.select %82, %83, %84 : vector<4x256xi1>, vector<4x256xf32>
    %c0_35 = arith.constant 0 : index
    %c0_36 = arith.constant 0 : index
    %c0_37 = arith.constant 0 : index
    %86 = vector.load %arg7[%c0_35, %c0_36, %c0_37] : memref<1x4x1xf32, #tpu.memory_space<vmem>>, vector<1x4x1xf32>
    %87 = vector.shape_cast %86 : vector<1x4x1xf32> to vector<4x1xf32>
    %cst_38 = arith.constant dense<0.000000e+00> : vector<4xf32>
    %88 = vector.multi_reduction <add>, %85, %cst_38 [1] : vector<4x256xf32> to vector<4xf32>
    %89 = vector.shape_cast %88 : vector<4xf32> to vector<4x1xf32>
    %90 = arith.addf %87, %89 : vector<4x1xf32>
    %c0_39 = arith.constant 0 : index
    %c0_40 = arith.constant 0 : index
    %c0_41 = arith.constant 0 : index
    %91 = vector.load %arg7[%c0_39, %c0_40, %c0_41] : memref<1x4x1xf32, #tpu.memory_space<vmem>>, vector<1x4x1xf32>
    %92 = vector.shape_cast %91 : vector<1x4x1xf32> to vector<4x1xf32>
    %93 = vector.shape_cast %90 : vector<4x1xf32> to vector<1x4x1xf32>
    tpu.vector_store %arg7[%c0_39, %c0_40, %c0_41], %93 {strides = array<i32>} : memref<1x4x1xf32, #tpu.memory_space<vmem>>, vector<1x4x1xf32>,
    %94 = arith.subf %85, %80 : vector<4x256xf32>
    %95 = math.absf %94 : vector<4x256xf32>
    %cst_42 = arith.constant 0.000000e+00 : f32
    %96 = vector.broadcast %cst_42 : f32 to vector<4x256xf32>
    %97 = arith.subf %96, %95 : vector<4x256xf32>
    %cst_43 = arith.constant 0.000000e+00 : f32
    %98 = vector.shape_cast %9 : vector<1x256xi1> to vector<1x256xi1>
    %99 = vector.broadcast %98 : vector<1x256xi1> to vector<4x256xi1>
    %100 = vector.broadcast %cst_43 : f32 to vector<4x256xf32>
    %101 = arith.select %99, %97, %100 : vector<4x256xi1>, vector<4x256xf32>
    %102 = tpu.bitcast %101 : vector<4x256xf32> -> vector<4x256xi32>
    %c1_i32 = arith.constant 1 : i32
    %c0_i32_44 = arith.constant 0 : i32
    %103 = vector.broadcast %c1_i32 : i32 to vector<4x256xi32>
    %104 = vector.broadcast %c0_i32_44 : i32 to vector<4x256xi32>
    %105 = arith.select %82, %103, %104 : vector<4x256xi1>, vector<4x256xi32>
    %c-2_i32 = arith.constant -2 : i32
    %106 = vector.broadcast %c-2_i32 : i32 to vector<4x256xi32>
    %107 = arith.andi %102, %106 : vector<4x256xi32>
    %108 = arith.ori %107, %105 : vector<4x256xi32>
    %109 = tpu.bitcast %108 : vector<4x256xi32> -> vector<4x256xf32>
    %c0_45 = arith.constant 0 : index
    %c0_46 = arith.constant 0 : index
    %110 = vector.load %arg8[%c0_45, %c0_46] : memref<4x256xf32, #tpu.memory_space<vmem>>, vector<4x256xf32>
    tpu.vector_store %arg8[%c0_45, %c0_46], %109 {strides = array<i32>} : memref<4x256xf32, #tpu.memory_space<vmem>>, vector<4x256xf32>,
    return
  }
  func.func @transform_0(%arg0: i32, %arg1: i32) -> (i32, i32, i32) {
    %c0_i32 = arith.constant 0 : i32
    %c0_i32_0 = arith.constant 0 : i32
    return %arg0, %c0_i32, %arg1 : i32, i32, i32
  }
  func.func @transform_1(%arg0: i32, %arg1: i32) -> (i32, i32, i32) {
    %c0_i32 = arith.constant 0 : i32
    %c0_i32_0 = arith.constant 0 : i32
    return %arg0, %c0_i32, %arg1 : i32, i32, i32
  }
  func.func @transform_2(%arg0: i32, %arg1: i32) -> (i32, i32) {
    %c0_i32 = arith.constant 0 : i32
    %c0_i32_0 = arith.constant 0 : i32
    %c0_i32_1 = arith.constant 0 : i32
    return %c0_i32, %c0_i32_0 : i32, i32
  }
  func.func @transform_3(%arg0: i32, %arg1: i32) -> (i32, i32, i32) {
    %c0_i32 = arith.constant 0 : i32
    %c0_i32_0 = arith.constant 0 : i32
    %c0_i32_1 = arith.constant 0 : i32
    return %arg0, %c0_i32, %c0_i32_0 : i32, i32, i32
  }
  func.func @transform_4(%arg0: i32, %arg1: i32) -> (i32, i32, i32) {
    %c0_i32 = arith.constant 0 : i32
    %c0_i32_0 = arith.constant 0 : i32
    %c0_i32_1 = arith.constant 0 : i32
    return %arg0, %c0_i32, %c0_i32_0 : i32, i32, i32
  }
  func.func @transform_5(%arg0: i32, %arg1: i32) -> (i32, i32, i32) {
    %c0_i32 = arith.constant 0 : i32
    %c0_i32_0 = arith.constant 0 : i32
    %c0_i32_1 = arith.constant 0 : i32
    return %arg0, %c0_i32, %c0_i32_0 : i32, i32, i32
  }
  func.func @transform_6(%arg0: i32, %arg1: i32) -> (i32, i32) {
    %c1_i32 = arith.constant 1 : i32
    %0 = arith.muli %arg0, %c1_i32 : i32
    %1 = arith.addi %0, %arg1 : i32
    %c0_i32 = arith.constant 0 : i32
    %c0_i32_0 = arith.constant 0 : i32
    return %c0_i32, %1 : i32, i32
  }
}

</mosaic_0001>

<llo_original>
// kernel: tpu_custom_call.1
$region0: #{tpu_custom_call.1}
  #allocation0 [shape = 'u32[]', space=smem, size = 0x4, offset = 0x4, fixed_abs, tag = 'smem constant byte address 0x4 - core index']
  #allocation1 [shape = 'u32[144,128]{1,0:T(1,128)}', space=vmem, size = 0x12000, scoped, tag = 'internal scratch']
  %s0 = inlined_call_operand.hbm [shape: f32[2,4,256], index: 0, kind: input, shape index: {}]
  %s1 = inlined_call_operand.vmem [shape: s32[2,1,256], index: 1, kind: input, shape index: {}]
  %s2 = inlined_call_operand.vmem [shape: f32[4,1], index: 2, kind: input, shape index: {}]
  %s3 = inlined_call_operand.vmem [shape: f32[2,1,1], index: 3, kind: output, shape index: {0}]
  %s4 = inlined_call_operand.vmem [shape: f32[2,1,1], index: 4, kind: output, shape index: {1}]
  %s5 = inlined_call_operand.vmem [shape: f32[2,4,1], index: 5, kind: output, shape index: {2}]
  %s6 = inlined_call_operand.hbm [shape: f32[4,512], index: 6, kind: output, shape index: {3}]
  %7 = xla_tuple %s3, %s4, %s5, %s6
  %s8 = sld [smem:[#allocation0]]
  $region77: #{tpu_custom_call.1} parent=0
    _
  %s10 = ssub.s32 1, %s8
  %s11 = scalar_select 0, %s10, %s8
  $region1: #{tpu_custom_call.1} parent=0
    #allocation2 [shape = 'u8[8192]{0}', space=vmem, size = 0x2000, scoped, tag = 'input window, operand 0']
    #allocation3 [shape = 's32[2]{0}', space=sflag, size = 0x8, scoped, tag = 'scoped memory for tpu_custom_call.1']
    #allocation4 [shape = 's32[2]{0}', space=sflag, size = 0x8, scoped, tag = 'scoped memory for tpu_custom_call.1']
    #allocation5 [shape = 'u8[8192]{0}', space=vmem, size = 0x2000, scoped, tag = 'output window, operand 3']
    %12 = vsyncpa [#allocation3], 0
    %s13 = scalar_lea.sflag [#allocation3], 1
    %14 = vsyncpa %s13, 0
    %15 = vsyncpa [#allocation4], 0
    %s16 = scalar_lea.sflag [#allocation4], 1
    %17 = vsyncpa %s16, 0
    loop: start=0, step=1, limit=4
    $region2: #{tpu_custom_call.1} parent=1 // loop_pre_header
      _
    $region3: #{tpu_custom_call.1} parent=1 // loop_header
      %s19 = sphi 0, %s23
      %p20 = scmp.ge.s32.totalorder %s19, 4
      %s26 = sphi 0, %s38
      %s27 = sphi 0, %s34
      %s28 = sphi 0, %s26
      %s29 = sphi 0, %s27
      %s30 = sphi 0, %s28
      %s31 = sphi 0, %s29
      %s43 = sphi 0, %s45
      %s46 = sphi 0, %s43
      %s47 = sphi 0, %s46
      %s63 = sphi 0, %s47
      %s71 = sphi 0, %s73
      %s74 = sphi 0, %s71
      %s75 = sphi 0, %s74
      %s91 = sphi 0, %s75
      %s95 = sphi 0, %s95
      %s97 = sphi 0, %s95
      %s98 = sphi 0, %s97
      %s112 = sphi 0, %s98
      %s118 = sphi 0, %s120
      %s121 = sphi 0, %s118
      %s122 = sphi 0, %s121
      %s138 = sphi 0, %s122
      %s144 = sphi 0, %s146
      %s147 = sphi 0, %s144
      %s148 = sphi 0, %s147
      %s164 = sphi 0, %s148
      %s170 = sphi 0, %s172
      %s173 = sphi 0, %s170
      %s174 = sphi 0, %s173
      %s190 = sphi 0, %s174
      %s198 = sphi 0, %s200
      %s201 = sphi 0, %s198
      %s202 = sphi 0, %s201
      %s218 = sphi 0, %s202
    $region4: #{tpu_custom_call.1} parent=1 // loop_header_branch
      %22 = sbr.rel (%p20) target = $region8
    $region5: #{tpu_custom_call.1} parent=1 // loop_body
      %s24 = ssub.s32 %s19, 1
      %s25 = ssub.s32 %s19, 2
      %s32 = sadd.s32 1, %s27
      %p33 = scmp.ge.s32.totalorder %s32, 1
      %s34 = scalar_select %p33, 0, %s32
      %s35 = sadd.s32 1, %s26
      %s36 = scalar_select %p33, %s35, %s26
      %p37 = scmp.ge.s32.totalorder %s36, 2
      %s38 = scalar_select %p37, 0, %s36
      %s39 = ssub.s32 %s26, %s38
      %s40 = ssub.s32 %s27, %s34
      %s41 = sor.u32 %s39, %s40
      %p42 = scmp.eq.s32.totalorder %s41, 0
      %s44 = sadd.s32 %s43, 1
      %s45 = scalar_select %p42, %s43, %s44
      %p48 = pneg %p42
      %p49 = scmp.eq.s32.totalorder %s19, 1
      %p50 = por %p48, %p49
      %p51 = scmp.ne.s32.totalorder %s43, %s46
      %p52 = scmp.eq.s32.totalorder %s19, 0
      %p53 = por %p51, %p52
      %p54 = scmp.ne.s32.totalorder %s43, %s46
      %p55 = scmp.eq.s32.totalorder %s24, 1
      %p56 = por %p54, %p55
      %p57 = scmp.ne.s32.totalorder %s46, %s47
      %p58 = scmp.eq.s32.totalorder %s24, 0
      %p59 = por %p57, %p58
      %p60 = scmp.ne.s32.totalorder %s46, %s47
      %p61 = scmp.eq.s32.totalorder %s25, 1
      %p62 = por %p60, %p61
      %p64 = scmp.ne.s32.totalorder %s47, %s63
      %p65 = scmp.eq.s32.totalorder %s25, 0
      %p66 = por %p64, %p65
      %s67 = ssub.s32 %s26, %s38
      %s68 = ssub.s32 %s27, %s34
      %s69 = sor.u32 %s67, %s68
      %p70 = scmp.eq.s32.totalorder %s69, 0
      %s72 = sadd.s32 %s71, 1
      %s73 = scalar_select %p70, %s71, %s72
      %p76 = pneg %p70
      %p77 = scmp.eq.s32.totalorder %s19, 1
      %p78 = por %p76, %p77
      %p79 = scmp.ne.s32.totalorder %s71, %s74
      %p80 = scmp.eq.s32.totalorder %s19, 0
      %p81 = por %p79, %p80
      %p82 = scmp.ne.s32.totalorder %s71, %s74
      %p83 = scmp.eq.s32.totalorder %s24, 1
      %p84 = por %p82, %p83
      %p85 = scmp.ne.s32.totalorder %s74, %s75
      %p86 = scmp.eq.s32.totalorder %s24, 0
      %p87 = por %p85, %p86
      %p88 = scmp.ne.s32.totalorder %s74, %s75
      %p89 = scmp.eq.s32.totalorder %s25, 1
      %p90 = por %p88, %p89
      %p92 = scmp.ne.s32.totalorder %s75, %s91
      %p93 = scmp.eq.s32.totalorder %s25, 0
      %p94 = por %p92, %p93
      %s96 = sadd.s32 %s95, 1
      %p99 = scmp.eq.s32.totalorder %s19, 1
      %p100 = scmp.ne.s32.totalorder %s95, %s97
      %p101 = scmp.eq.s32.totalorder %s19, 0
      %p102 = por %p100, %p101
      %p103 = scmp.ne.s32.totalorder %s95, %s97
      %p104 = scmp.eq.s32.totalorder %s24, 1
      %p105 = por %p103, %p104
      %p106 = scmp.ne.s32.totalorder %s97, %s98
      %p107 = scmp.eq.s32.totalorder %s24, 0
      %p108 = por %p106, %p107
      %p109 = scmp.ne.s32.totalorder %s97, %s98
      %p110 = scmp.eq.s32.totalorder %s25, 1
      %p111 = por %p109, %p110
      %p113 = scmp.ne.s32.totalorder %s98, %s112
      %p114 = scmp.eq.s32.totalorder %s25, 0
      %p115 = por %p113, %p114
      %s116 = ssub.s32 %s26, %s38
      %p117 = scmp.eq.s32.totalorder %s116, 0
      %s119 = sadd.s32 %s118, 1
      %s120 = scalar_select %p117, %s118, %s119
      %p123 = pneg %p117
      %p124 = scmp.eq.s32.totalorder %s19, 1
      %p125 = por %p123, %p124
      %p126 = scmp.ne.s32.totalorder %s118, %s121
      %p127 = scmp.eq.s32.totalorder %s19, 0
      %p128 = por %p126, %p127
      %p129 = scmp.ne.s32.totalorder %s118, %s121
      %p130 = scmp.eq.s32.totalorder %s24, 1
      %p131 = por %p129, %p130
      %p132 = scmp.ne.s32.totalorder %s121, %s122
      %p133 = scmp.eq.s32.totalorder %s24, 0
      %p134 = por %p132, %p133
      %p135 = scmp.ne.s32.totalorder %s121, %s122
      %p136 = scmp.eq.s32.totalorder %s25, 1
      %p137 = por %p135, %p136
      %p139 = scmp.ne.s32.totalorder %s122, %s138
      %p140 = scmp.eq.s32.totalorder %s25, 0
      %p141 = por %p139, %p140
      %s142 = ssub.s32 %s26, %s38
      %p143 = scmp.eq.s32.totalorder %s142, 0
      %s145 = sadd.s32 %s144, 1
      %s146 = scalar_select %p143, %s144, %s145
      %p149 = pneg %p143
      %p150 = scmp.eq.s32.totalorder %s19, 1
      %p151 = por %p149, %p150
      %p152 = scmp.ne.s32.totalorder %s144, %s147
      %p153 = scmp.eq.s32.totalorder %s19, 0
      %p154 = por %p152, %p153
      %p155 = scmp.ne.s32.totalorder %s144, %s147
      %p156 = scmp.eq.s32.totalorder %s24, 1
      %p157 = por %p155, %p156
      %p158 = scmp.ne.s32.totalorder %s147, %s148
      %p159 = scmp.eq.s32.totalorder %s24, 0
      %p160 = por %p158, %p159
      %p161 = scmp.ne.s32.totalorder %s147, %s148
      %p162 = scmp.eq.s32.totalorder %s25, 1
      %p163 = por %p161, %p162
      %p165 = scmp.ne.s32.totalorder %s148, %s164
      %p166 = scmp.eq.s32.totalorder %s25, 0
      %p167 = por %p165, %p166
      %s168 = ssub.s32 %s26, %s38
      %p169 = scmp.eq.s32.totalorder %s168, 0
      %s171 = sadd.s32 %s170, 1
      %s172 = scalar_select %p169, %s170, %s171
      %p175 = pneg %p169
      %p176 = scmp.eq.s32.totalorder %s19, 1
      %p177 = por %p175, %p176
      %p178 = scmp.ne.s32.totalorder %s170, %s173
      %p179 = scmp.eq.s32.totalorder %s19, 0
      %p180 = por %p178, %p179
      %p181 = scmp.ne.s32.totalorder %s170, %s173
      %p182 = scmp.eq.s32.totalorder %s24, 1
      %p183 = por %p181, %p182
      %p184 = scmp.ne.s32.totalorder %s173, %s174
      %p185 = scmp.eq.s32.totalorder %s24, 0
      %p186 = por %p184, %p185
      %p187 = scmp.ne.s32.totalorder %s173, %s174
      %p188 = scmp.eq.s32.totalorder %s25, 1
      %p189 = por %p187, %p188
      %p191 = scmp.ne.s32.totalorder %s174, %s190
      %p192 = scmp.eq.s32.totalorder %s25, 0
      %p193 = por %p191, %p192
      %s194 = sadd.s32 %s26, %s27
      %s195 = sadd.s32 %s38, %s34
      %s196 = ssub.s32 %s194, %s195
      %p197 = scmp.eq.s32.totalorder %s196, 0
      %s199 = sadd.s32 %s198, 1
      %s200 = scalar_select %p197, %s198, %s199
      %p203 = pneg %p197
      %p204 = scmp.eq.s32.totalorder %s19, 1
      %p205 = por %p203, %p204
      %p206 = scmp.ne.s32.totalorder %s198, %s201
      %p207 = scmp.eq.s32.totalorder %s19, 0
      %p208 = por %p206, %p207
      %p209 = scmp.ne.s32.totalorder %s198, %s201
      %p210 = scmp.eq.s32.totalorder %s24, 1
      %p211 = por %p209, %p210
      %p212 = scmp.ne.s32.totalorder %s201, %s202
      %p213 = scmp.eq.s32.totalorder %s24, 0
      %p214 = por %p212, %p213
      %p215 = scmp.ne.s32.totalorder %s201, %s202
      %p216 = scmp.eq.s32.totalorder %s25, 1
      %p217 = por %p215, %p216
      %p219 = scmp.ne.s32.totalorder %s202, %s218
      %p220 = scmp.eq.s32.totalorder %s25, 0
      %p221 = por %p219, %p220
      %p222 = scmp.le.s32.totalorder 1, %s19
      %p223 = scmp.lt.s32.totalorder %s19, 3
      %p224 = pnand %p222, %p223
      %p225 = pneg %p224
      // Predicated region
      $region9: #{tpu_custom_call.1} parent=5 // pred_check
        _
      $region10: #{tpu_custom_call.1} parent=5 // pred_check_branch
        %227 = sbr.rel (%p224) target = $region12
      $region11: #{tpu_custom_call.1} parent=5 // pred_region
        %s228 = ssub.s32 %s19, 1
        // Predicated region
        $region13: #{tpu_custom_call.1} parent=11 // pred_check
          %p229 = pneg %p108
        $region14: #{tpu_custom_call.1} parent=11 // pred_check_branch
          %231 = sbr.rel (%p229) target = $region16
        $region15: #{tpu_custom_call.1} parent=11 // pred_region
          _
        $region16: #{tpu_custom_call.1} parent=11 // pred_fallthru
          _
      $region12: #{tpu_custom_call.1} parent=5 // pred_fallthru
        _
      %p232 = scmp.lt.s32.totalorder %s19, 2
      // Predicated region
      $region17: #{tpu_custom_call.1} parent=5 // pred_check
        %p233 = pneg %p232
      $region18: #{tpu_custom_call.1} parent=5 // pred_check_branch
        %235 = sbr.rel (%p233) target = $region20
      $region19: #{tpu_custom_call.1} parent=5 // pred_region
        // Predicated region
        $region21: #{tpu_custom_call.1} parent=19 // pred_check
          %p236 = pneg %p53
        $region22: #{tpu_custom_call.1} parent=19 // pred_check_branch
          %238 = sbr.rel (%p236) target = $region24
        $region23: #{tpu_custom_call.1} parent=19 // pred_region
          %s239 = sand.u32 %s43, 1
          %s240 = scalar_lea.sflag [#allocation3], %s239
          %s241 = sand.u32 %s43, 1
          %s242 = smul.addr %s241, 8
          %s243 = scalar_lea.vmem [#allocation2], %s242
          %s244 = smul.u32 2, %s27
          %s246 = ssub.s32 128, 128
          %247 = vsyncadd %s240, %s246
          %s248 = smul.addr %s26, 2
          %s249 = sadd.s32 %s244, %s248
          %s250 = smul.addr %s249, 64
          %s251 = scalar_lea.hbm %s0, %s250
          %s253 = sshll.u32 %s243, 4
          %s254 = int_to_ptr.vmem [resolvable:$true] %s253
          %256 = dma.hbm_to_vmem [thread:$0]  %s251, 128, %s254, %s240
        $region24: #{tpu_custom_call.1} parent=19 // pred_fallthru
          _
        // Predicated region
        $region25: #{tpu_custom_call.1} parent=19 // pred_check
          %p257 = pneg %p81
        $region26: #{tpu_custom_call.1} parent=19 // pred_check_branch
          %259 = sbr.rel (%p257) target = $region28
        $region27: #{tpu_custom_call.1} parent=19 // pred_region
          %s260 = smul.u32 2, %s27
          %p261 = scmp.lt.s32.totalorder %s26, 1
          %s262 = scalar_select %p261, %s26, 1
          %p263 = scmp.lt.s32.totalorder %s260, 1
          %s264 = scalar_select %p263, %s260, 1
          %s265 = smul.addr %s262, 2
          %s266 = sadd.s32 %s264, %s265
          %s267 = scalar_lea.vmem %s1, %s266
          %s268 = smul.u32 2, %s27
        $region28: #{tpu_custom_call.1} parent=19 // pred_fallthru
          _
      $region20: #{tpu_custom_call.1} parent=5 // pred_fallthru
        _
      %p269 = scmp.le.s32.totalorder 1, %s19
      %p270 = scmp.lt.s32.totalorder %s19, 3
      %p271 = pnand %p269, %p270
      %p272 = pneg %p271
      // Predicated region
      $region29: #{tpu_custom_call.1} parent=5 // pred_check
        _
      $region30: #{tpu_custom_call.1} parent=5 // pred_check_branch
        %274 = sbr.rel (%p271) target = $region32
      $region31: #{tpu_custom_call.1} parent=5 // pred_region
        %s275 = ssub.s32 %s19, 1
        %s276 = sand.u32 %s46, 1
        %s277 = scalar_lea.sflag [#allocation3], %s276
        %s278 = sand.u32 %s46, 1
        %s279 = smul.addr %s278, 8
        %s280 = scalar_lea.vmem [#allocation2], %s279
        // Predicated region
        $region33: #{tpu_custom_call.1} parent=31 // pred_check
          %p281 = pneg %p59
        $region34: #{tpu_custom_call.1} parent=31 // pred_check_branch
          %283 = sbr.rel (%p281) target = $region36
        $region35: #{tpu_custom_call.1} parent=31 // pred_region
          %284 = dma.done %s277, 128
        $region36: #{tpu_custom_call.1} parent=31 // pred_fallthru
          _
        %s285 = sand.u32 %s46, 1
        %s286 = scalar_lea.sflag [#allocation3], %s285
        %s287 = sand.u32 %s46, 1
        %s288 = smul.addr %s287, 8
        %s289 = scalar_lea.vmem [#allocation2], %s288
        %p290 = pneg %p59
        %p291 = pneg %p56
        %s292 = smul.u32 2, %s29
        %p293 = scmp.lt.s32.totalorder %s28, 1
        %s294 = scalar_select %p293, %s28, 1
        %p295 = scmp.lt.s32.totalorder %s292, 1
        %s296 = scalar_select %p295, %s292, 1
        %s297 = smul.addr %s294, 2
        %s298 = sadd.s32 %s296, %s297
        %s299 = scalar_lea.vmem %s1, %s298
        %p300 = pneg %p87
        %p301 = pneg %p84
        %p302 = pneg %p108
        %p303 = pneg %p105
        %p304 = pneg %p134
        %p305 = pneg %p131
        %p306 = scmp.lt.s32.totalorder %s28, 1
        %s307 = scalar_select %p306, %s28, 1
        %s308 = scalar_lea.vmem %s3, %s307
        %p309 = pneg %p160
        %p310 = pneg %p157
        %p311 = scmp.lt.s32.totalorder %s28, 1
        %s312 = scalar_select %p311, %s28, 1
        %s313 = scalar_lea.vmem %s4, %s312
        %p314 = pneg %p186
        %p315 = pneg %p183
        %p316 = scmp.lt.s32.totalorder %s28, 1
        %s317 = scalar_select %p316, %s28, 1
        %s318 = smul.addr %s317, 4
        %s319 = scalar_lea.vmem %s5, %s318
        %p320 = pneg %p214
        %p321 = pneg %p211
        %s322 = sand.u32 %s201, 1
        %s323 = scalar_lea.sflag [#allocation4], %s322
        %s324 = sand.u32 %s201, 1
        %s325 = smul.addr %s324, 8
        %s326 = scalar_lea.vmem [#allocation5], %s325
        %s327 = smul.u32 2, %s29
        %s328 = smul.u32 2, %s29
        %p329 = scmp.lt.s32.totalorder %s28, 1
        %s330 = scalar_select %p329, %s28, 1
        %p331 = scmp.lt.s32.totalorder %s328, 1
        %s332 = scalar_select %p331, %s328, 1
        %s333 = smul.addr %s330, 2
        %s334 = sadd.s32 %s332, %s333
        %s335 = scalar_lea.vmem %s1, %s334
        %s336 = smul.u32 2, %s29
        %p337 = scmp.lt.s32.totalorder %s28, 1
        %s338 = scalar_select %p337, %s28, 1
        %s339 = scalar_lea.vmem %s3, %s338
        %p340 = scmp.lt.s32.totalorder %s28, 1
        %s341 = scalar_select %p340, %s28, 1
        %s342 = scalar_lea.vmem %s4, %s341
        %p343 = scmp.lt.s32.totalorder %s28, 1
        %s344 = scalar_select %p343, %s28, 1
        %s345 = smul.addr %s344, 4
        %s346 = scalar_lea.vmem %s5, %s345
        %s347 = sadd.s32 %s28, %s29
        %s348 = smul.u32 2, %s347
        %p349 = scmp.eq.s32.totalorder %s29, 0
        // Predicated region
        $region37: #{tpu_custom_call.1} parent=31 // pred_check
          %p350 = pneg %p349
        $region38: #{tpu_custom_call.1} parent=31 // pred_check_branch
          %352 = sbr.rel (%p350) target = $region40
        $region39: #{tpu_custom_call.1} parent=31 // pred_region
          %vm353 = vcmask 0
          %354 = vst.msk [vmem:[%s339] sm:$0x1] %vm353, 0.0
          %355 = vst.msk [vmem:[%s342] sm:$0x1] %vm353, 0.0
          %vm356 = vcmask 3072
          %357 = vst.msk [vmem:[%s346] sm:$0xf] %vm356, 0.0
        $region40: #{tpu_custom_call.1} parent=31 // pred_fallthru
          _
        %v358 = vld [vmem:[%s280] sm:$0xff]
        %v359 = vld [vmem:[%s335] sm:$0x3]
        %v360 = vld [vmem:[%s2] sm:$0xf]
        %vm361 = vcmp.ne.s32.totalorder %v359, 9999
        %v362 = vsel %vm361, 1, 0
        %v363 = vcvt.s32.f32 %v362
        %v365 = vcombine.high %v358, %v358
        %vm367 = vcmask 1043456
        %v368 = vsel %vm367, %v358, -inf
        %v369 = vrot.slane %v368, 4
        %v370 = vmax.f32 %v368, %v369
        %v371 = vrot.slane %v370, 2
        %v372 = vmax.f32 %v370, %v371
        %v373 = vrot.slane %v372, 1
        %v374 = vmax.f32 %v372, %v373
        %v375 = vsel %vm367, %v365, -inf
        %v376 = vrot.slane %v375, 4
        %v377 = vmax.f32 %v375, %v376
        %v378 = vrot.slane %v377, 2
        %v379 = vmax.f32 %v377, %v378
        %v380 = vrot.slane %v379, 1
        %v381 = vmax.f32 %v379, %v380
        %v384 = vcombine.low %v374, %v381
        %v386 = vsub.f32 %v358, %v384
        %v387 = vmul.f32 %v386, 1.442695
        %v388 = vpow.pop %v387
        %v390 = vcombine.high %v388, %v388
        %v392 = vsel %vm367, %v388, 0.0
        %v393 = vrot.slane %v392, 4
        %v394 = vadd.f32 %v392, %v393
        %v395 = vrot.slane %v394, 2
        %v396 = vadd.f32 %v394, %v395
        %v397 = vrot.slane %v396, 1
        %v398 = vadd.f32 %v396, %v397
        %v399 = vsel %vm367, %v390, 0.0
        %v400 = vrot.slane %v399, 4
        %v401 = vadd.f32 %v399, %v400
        %v402 = vrot.slane %v401, 2
        %v403 = vadd.f32 %v401, %v402
        %v404 = vrot.slane %v403, 1
        %v405 = vadd.f32 %v403, %v404
        %v406 = vrcp.pop %v398
        %v407 = vrcp.pop %v405
        %v410 = vcombine.low %v406, %v407
        %v412 = vmul.f32 %v388, %v410
        %v413 = vadd.f32 %v412, 1e-08
        %v414 = vlog2.pop %v398
        %v415 = vmul.f32 %v414, 0.6931472
        %v416 = vlog2.pop %v405
        %v417 = vmul.f32 %v416, 0.6931472
        %v420 = vcombine.low %v415, %v417
        %v422 = vsub.f32 %v386, %v420
        %v423 = vlaneseq
        %v424 = vshrl.u32 %v423, 7
        %v425 = vsel %vm361, %v359, 0
        %v426 = vlaneseq
        %v427 = vshrl.u32 %v426, 7
        %v428 = vsub.s32 0, %v427
        %v429 = vrot.slane %v425, %v428
        %v430 = vlaneseq
        %v431 = vshrl.u32 %v430, 7
        %v432 = vsub.s32 1, %v431
        %v433 = vrot.slane %v425, %v432
        %vm434 = vcmp.eq.s32.totalorder %v424, %v429
        %vm435 = vcmp.eq.s32.totalorder %v424, %v433
        %v436 = vsel %vm434, 1.0, 0.0
        %v437 = vsel %vm435, 1.0, 0.0
        %v438 = vadd.f32 %v436, 1e-06
        %v439 = vadd.f32 %v437, 1e-06
        %v440 = vsub.f32 1.0, %v413
        %v441 = vmul.f32 %v440, %v440
        %v442 = vsub.f32 0.0, %v441
        %v443 = vmul.f32 %v442, %v422
        %v445 = vcombine.high %v443, %v443
        %v447 = vmul.f32 %v438, %v443
        %v448 = vmul.f32 %v439, %v445
        %v449 = vsel %vm367, %v447, 0.0
        %v450 = vrot.slane %v449, 4
        %v451 = vadd.f32 %v449, %v450
        %v452 = vrot.slane %v451, 2
        %v453 = vadd.f32 %v451, %v452
        %v454 = vrot.slane %v453, 1
        %v455 = vadd.f32 %v453, %v454
        %v456 = vsel %vm367, %v448, 0.0
        %v457 = vrot.slane %v456, 4
        %v458 = vadd.f32 %v456, %v457
        %v459 = vrot.slane %v458, 2
        %v460 = vadd.f32 %v458, %v459
        %v461 = vrot.slane %v460, 1
        %v462 = vadd.f32 %v460, %v461
        %v463 = vlaneseq
        %v464 = vshrl.u32 %v463, 7
        %v465 = vsub.s32 0, %v464
        %v466 = vrot.slane %v359, %v465
        %v467 = vlaneseq
        %v468 = vshrl.u32 %v467, 7
        %v469 = vsub.s32 1, %v468
        %v470 = vrot.slane %v359, %v469
        %vm471 = vcmp.eq.s32.totalorder %v424, %v466
        %vm472 = vcmp.eq.s32.totalorder %v424, %v470
        %474 = vset.pattern.permute.xlu0 0
        %475 = vperm.xlu0 %474, %v360
        %v476 = vpop.permute.xlu0 %475
        %v478 = vsel %vm471, %v476, 0.0
        %v479 = vsel %vm472, %v476, 0.0
        %v480 = vsel %vm367, %v478, 0.0
        %v481 = vrot.slane %v480, 4
        %v482 = vadd.f32 %v480, %v481
        %v483 = vrot.slane %v482, 2
        %v484 = vadd.f32 %v482, %v483
        %v485 = vrot.slane %v484, 1
        %v486 = vadd.f32 %v484, %v485
        %v487 = vsel %vm367, %v479, 0.0
        %v488 = vrot.slane %v487, 4
        %v489 = vadd.f32 %v487, %v488
        %v490 = vrot.slane %v489, 2
        %v491 = vadd.f32 %v489, %v490
        %v492 = vrot.slane %v491, 1
        %v493 = vadd.f32 %v491, %v492
        %v494 = vld [vmem:[%s339] sm:$0x1]
        %v496 = vlaneseq
        %v497 = vshrl.u32 %v496, 7
        %v498 = vsub.s32 0, %v497
        %v499 = vrot.slane %v363, %v498
        %v500 = vlaneseq
        %v501 = vshrl.u32 %v500, 7
        %v502 = vsub.s32 1, %v501
        %v503 = vrot.slane %v363, %v502
        %v506 = vmul.f32 %v455, %v499
        %v507 = vmul.f32 %v462, %v503
        %v508 = vmul.f32 %v506, %v486
        %v509 = vmul.f32 %v507, %v493
        %vm510 = vcmask 1040384
        %v511 = vsel %vm510, %v508, 0.0
        %v512 = vsel %vm510, %v509, 0.0
        %v513 = vadd.f32 %v511, %v512
        %514 = vadd.xlane.f32.xlu0 %v513
        %v515 = vpop.xlane.xlu0 %514
        %v516 = vrot.slane %v515, 4
        %v517 = vadd.f32 %v515, %v516
        %v518 = vrot.slane %v517, 2
        %v519 = vadd.f32 %v517, %v518
        %v520 = vrot.slane %v519, 1
        %v521 = vadd.f32 %v519, %v520
        %s522 = vtos %v521
        %v523 = vstv %s522
        %v524 = vadd.f32 %v494, %v523
        %vm525 = vcmask 0
        %526 = vst.msk [vmem:[%s339] sm:$0x1] %vm525, %v524
        %v527 = vld [vmem:[%s342] sm:$0x1]
        %v528 = vsel %vm510, %v499, 0.0
        %v529 = vsel %vm510, %v503, 0.0
        %v530 = vadd.f32 %v528, %v529
        %531 = vadd.xlane.f32.xlu0 %v530
        %v532 = vpop.xlane.xlu0 %531
        %v533 = vrot.slane %v532, 4
        %v534 = vadd.f32 %v532, %v533
        %v535 = vrot.slane %v534, 2
        %v536 = vadd.f32 %v534, %v535
        %v537 = vrot.slane %v536, 1
        %v538 = vadd.f32 %v536, %v537
        %s539 = vtos %v538
        %v540 = vstv %s539
        %v541 = vadd.f32 %v527, %v540
        %542 = vst.msk [vmem:[%s342] sm:$0x1] %vm525, %v541
        %v543 = vmul.f32 %v374, 1.442695
        %v544 = vpow.pop %v543
        %v545 = vmul.f32 %v381, 1.442695
        %v546 = vpow.pop %v545
        %v549 = vcombine.low %v544, %v546
        %v551 = vmul.f32 %v388, %v549
        %v552 = vsel %vm471, 1.0, 0.0
        %v553 = vsel %vm472, 1.0, 0.0
        %v554 = vld [vmem:[%s346] sm:$0xf]
        %v555 = vsel %vm367, %v552, 0.0
        %v556 = vsel %vm367, %v553, 0.0
        %v557 = vadd.f32 %v555, %v556
        %558 = vadd.xlane.f32.xlu0 %v557
        %v559 = vpop.xlane.xlu0 %558
        %v560 = vadd.f32 %v554, %v559
        %vm561 = vcmask 3072
        %562 = vst.msk [vmem:[%s346] sm:$0xf] %vm561, %v560
        %v564 = vcombine.high %v551, %v551
        %v566 = vsub.f32 %v552, %v551
        %v567 = vsub.f32 %v553, %v564
        %v568 = vand.u32 2147483647, %v566
        %v569 = vand.u32 2147483647, %v567
        %v570 = vsub.f32 0.0, %v568
        %v571 = vsub.f32 0.0, %v569
        %v572 = vlaneseq
        %v573 = vshrl.u32 %v572, 7
        %v574 = vsub.s32 0, %v573
        %v575 = vrot.slane %v362, %v574
        %v576 = vlaneseq
        %v577 = vshrl.u32 %v576, 7
        %v578 = vsub.s32 1, %v577
        %v579 = vrot.slane %v362, %v578
        %vm580 = vcmp.eq.s32.totalorder %v575, 1
        %vm581 = vcmp.eq.s32.totalorder %v579, 1
        %v582 = vsel %vm580, %v570, 0.0
        %v583 = vsel %vm581, %v571, 0.0
        %v586 = vsel %vm471, 1, 0
        %v587 = vsel %vm472, 1, 0
        %v588 = vand.u32 %v582, 4294967294
        %v589 = vand.u32 %v583, 4294967294
        %v590 = vor.u32 %v588, %v586
        %v591 = vor.u32 %v589, %v587
        %v592 = vcombine.low %v590, %v591
        %594 = vst [vmem:[%s326] sm:$0xff] %v592
        %p595 = scmp.lt.s32.totalorder %s28, 1
        %s596 = scalar_select %p595, %s28, 1
        %s597 = scalar_lea.vmem %s3, %s596
        %p598 = scmp.lt.s32.totalorder %s28, 1
        %s599 = scalar_select %p598, %s28, 1
        %s600 = scalar_lea.vmem %s4, %s599
        %p601 = scmp.lt.s32.totalorder %s28, 1
        %s602 = scalar_select %p601, %s28, 1
        %s603 = smul.addr %s602, 4
        %s604 = scalar_lea.vmem %s5, %s603
        %s605 = sand.u32 %s201, 1
        %s606 = scalar_lea.sflag [#allocation4], %s605
        %s607 = sand.u32 %s201, 1
        %s608 = smul.addr %s607, 8
        %s609 = scalar_lea.vmem [#allocation5], %s608
        // Predicated region
        $region41: #{tpu_custom_call.1} parent=31 // pred_check
          %p610 = pneg %p131
        $region42: #{tpu_custom_call.1} parent=31 // pred_check_branch
          %612 = sbr.rel (%p610) target = $region44
        $region43: #{tpu_custom_call.1} parent=31 // pred_region
          _
        $region44: #{tpu_custom_call.1} parent=31 // pred_fallthru
          _
        // Predicated region
        $region45: #{tpu_custom_call.1} parent=31 // pred_check
          %p613 = pneg %p157
        $region46: #{tpu_custom_call.1} parent=31 // pred_check_branch
          %615 = sbr.rel (%p613) target = $region48
        $region47: #{tpu_custom_call.1} parent=31 // pred_region
          _
        $region48: #{tpu_custom_call.1} parent=31 // pred_fallthru
          _
        // Predicated region
        $region49: #{tpu_custom_call.1} parent=31 // pred_check
          %p616 = pneg %p183
        $region50: #{tpu_custom_call.1} parent=31 // pred_check_branch
          %618 = sbr.rel (%p616) target = $region52
        $region51: #{tpu_custom_call.1} parent=31 // pred_region
          _
        $region52: #{tpu_custom_call.1} parent=31 // pred_fallthru
          _
        // Predicated region
        $region53: #{tpu_custom_call.1} parent=31 // pred_check
          %p619 = pneg %p211
        $region54: #{tpu_custom_call.1} parent=31 // pred_check_branch
          %621 = sbr.rel (%p619) target = $region56
        $region55: #{tpu_custom_call.1} parent=31 // pred_region
          %s622 = sadd.s32 %s28, %s29
          %s623 = smul.u32 2, %s622
          %s625 = ssub.s32 128, 128
          %626 = vsyncadd %s606, %s625
          %s627 = smul.addr %s623, 64
          %s628 = scalar_lea.hbm %s6, %s627
          %s630 = sshll.u32 %s609, 4
          %s631 = int_to_ptr.vmem [resolvable:$true] %s630
          %633 = dma.vmem_to_hbm [thread:$0]  %s631, 128, %s628, %s606
        $region56: #{tpu_custom_call.1} parent=31 // pred_fallthru
          _
      $region32: #{tpu_custom_call.1} parent=5 // pred_fallthru
        _
      %p634 = scmp.le.s32.totalorder 2, %s19
      // Predicated region
      $region57: #{tpu_custom_call.1} parent=5 // pred_check
        %p635 = pneg %p634
      $region58: #{tpu_custom_call.1} parent=5 // pred_check_branch
        %637 = sbr.rel (%p635) target = $region60
      $region59: #{tpu_custom_call.1} parent=5 // pred_region
        %s638 = ssub.s32 %s19, 2
        // Predicated region
        $region61: #{tpu_custom_call.1} parent=59 // pred_check
          %p639 = pneg %p137
        $region62: #{tpu_custom_call.1} parent=59 // pred_check_branch
          %641 = sbr.rel (%p639) target = $region64
        $region63: #{tpu_custom_call.1} parent=59 // pred_region
          %p642 = scmp.lt.s32.totalorder %s30, 1
          %s643 = scalar_select %p642, %s30, 1
          %s644 = scalar_lea.vmem %s3, %s643
        $region64: #{tpu_custom_call.1} parent=59 // pred_fallthru
          _
        // Predicated region
        $region65: #{tpu_custom_call.1} parent=59 // pred_check
          %p645 = pneg %p163
        $region66: #{tpu_custom_call.1} parent=59 // pred_check_branch
          %647 = sbr.rel (%p645) target = $region68
        $region67: #{tpu_custom_call.1} parent=59 // pred_region
          %p648 = scmp.lt.s32.totalorder %s30, 1
          %s649 = scalar_select %p648, %s30, 1
          %s650 = scalar_lea.vmem %s4, %s649
        $region68: #{tpu_custom_call.1} parent=59 // pred_fallthru
          _
        // Predicated region
        $region69: #{tpu_custom_call.1} parent=59 // pred_check
          %p651 = pneg %p189
        $region70: #{tpu_custom_call.1} parent=59 // pred_check_branch
          %653 = sbr.rel (%p651) target = $region72
        $region71: #{tpu_custom_call.1} parent=59 // pred_region
          %p654 = scmp.lt.s32.totalorder %s30, 1
          %s655 = scalar_select %p654, %s30, 1
          %s656 = smul.addr %s655, 4
          %s657 = scalar_lea.vmem %s5, %s656
        $region72: #{tpu_custom_call.1} parent=59 // pred_fallthru
          _
        // Predicated region
        $region73: #{tpu_custom_call.1} parent=59 // pred_check
          %p658 = pneg %p217
        $region74: #{tpu_custom_call.1} parent=59 // pred_check_branch
          %660 = sbr.rel (%p658) target = $region76
        $region75: #{tpu_custom_call.1} parent=59 // pred_region
          %s661 = sand.u32 %s202, 1
          %s662 = scalar_lea.sflag [#allocation4], %s661
          %s663 = sand.u32 %s202, 1
          %s664 = smul.addr %s663, 8
          %s665 = scalar_lea.vmem [#allocation5], %s664
          %666 = dma.done %s662, 128
        $region76: #{tpu_custom_call.1} parent=59 // pred_fallthru
          _
      $region60: #{tpu_custom_call.1} parent=5 // pred_fallthru
        _
    $region6: #{tpu_custom_call.1} parent=1 // loop_footer
      %s23 = sadd.s32 1, %s19
    $region7: #{tpu_custom_call.1} parent=1 // loop_footer_branch
      %18 = sbr.rel target = $region3
    $region8: #{tpu_custom_call.1} parent=1 // loop_exit
      _
    %667 = vsyncpa [#allocation3], 1
    %s668 = scalar_lea.sflag [#allocation3], 1
    %669 = vsyncpa %s668, 1
    %670 = vsyncpa [#allocation4], 1
    %s671 = scalar_lea.sflag [#allocation4], 1
    %672 = vsyncpa %s671, 1

</llo_original>
